<compile_context>
chip_gen: v7x
topology: tpu7x:2x2x1
jax: 0.10.0
libtpu: 0.0.40
codegen_flags: <defaults>
</compile_context>

<pallas_src>
import jax
import jax.numpy as jnp
from jax import lax
from jax.experimental import pallas as pl
from jax.experimental.pallas import tpu as pltpu


def _lora_kernel(x_ref, wd_ref, wu_ref, o_ref):
    # x_ref:  (TM, Din)      VMEM tile of activations
    # wd_ref: (rank, Din)    W_down in its native PyTorch layout (lane-dense)
    # wu_ref: (rank, Dout)   W_up transposed once in the wrapper (lane-dense)
    # o_ref:  (TM, Dout)
    # h = x @ W_down.T  -> contract last dim of x with last dim of W_down.
    h = lax.dot_general(
        x_ref[...], wd_ref[...],
        dimension_numbers=(((1,), (1,)), ((), ())),
        preferred_element_type=jnp.float32,
    )  # (TM, rank), f32 accumulation
    # y = h @ W_up.T  == h @ wu_t
    y = jnp.dot(h, wu_ref[...], preferred_element_type=jnp.float32)  # (TM, Dout)
    o_ref[...] = y.astype(o_ref.dtype)


def _pick_tm(m, input_dim, output_dim, itemsize, vmem_budget_bytes):
    """Largest multiple of 8 whose double-buffered x+out tiles fit the budget."""
    per_row = 2 * (input_dim + output_dim) * itemsize  # 2x: double buffering
    tm = max(8, (vmem_budget_bytes // max(per_row, 1)) // 8 * 8)
    tm = min(tm, 1024)                    # amortizes ~0.35us/step overhead; avoids OOM
    m_pad8 = ((m + 7) // 8) * 8
    return min(tm, m_pad8)


def lora_forward(x, w_down, w_up, *, tm=None, vmem_budget_bytes=8 << 20):
    """x: (..., input_dim); w_down: (rank, input_dim); w_up: (output_dim, rank)."""
    *lead, input_dim = x.shape
    rank = w_down.shape[0]
    output_dim = w_up.shape[0]

    x2d = x.reshape(-1, input_dim)                 # (M, Din)
    M = x2d.shape[0]
    itemsize = jnp.dtype(x.dtype).itemsize
    if tm is None:
        tm = _pick_tm(M, input_dim, output_dim, itemsize, vmem_budget_bytes)

    # Pad M up to a multiple of TM so every grid step sees a full tile.
    m_pad = pl.cdiv(M, tm) * tm
    if m_pad != M:
        x2d = jnp.pad(x2d, ((0, m_pad - M), (0, 0)))

    wu_t = w_up.T                                  # (rank, Dout): lane-dense weight

    out = pl.pallas_call(
        _lora_kernel,
        out_shape=jax.ShapeDtypeStruct((m_pad, output_dim), x.dtype),
        grid_spec=pl.GridSpec(
            grid=(m_pad // tm,),
            in_specs=[
                pl.BlockSpec((tm, input_dim), lambda i: (i, 0)),     # x tiles over M
                pl.BlockSpec((rank, input_dim), lambda i: (0, 0)),   # W_down resident
                pl.BlockSpec((rank, output_dim), lambda i: (0, 0)),  # W_up^T resident
            ],
            out_specs=pl.BlockSpec((tm, output_dim), lambda i: (i, 0)),
        ),
        compiler_params=pltpu.CompilerParams(
            dimension_semantics=("parallel",),     # shards M tiles across TCs on v7x
        ),
    )(x2d, w_down, wu_t)

    if m_pad != M:
        out = out[:M]
    return out.reshape(*lead, output_dim)


if __name__ == "__main__":
    # Small shapes consistent with the module: batch=2, seq=8, hidden=32, rank=4
    batch, seq = 2, 8
    input_dim, output_dim, rank = 32, 32, 4

    key = jax.random.PRNGKey(0)
    kx, kd, ku = jax.random.split(key, 3)

    x = jax.random.normal(kx, (batch, seq, input_dim), dtype=jnp.float32)
    # nn.Linear weight shapes: (out_features, in_features)
    bound_d = 1.0 / (input_dim ** 0.5)
    bound_u = 1.0 / (rank ** 0.5)
    w_down = jax.random.uniform(kd, (rank, input_dim), jnp.float32, -bound_d, bound_d)
    w_up = jax.random.uniform(ku, (output_dim, rank), jnp.float32, -bound_u, bound_u)

    y = lora_forward(x, w_down, w_up)
    jax.block_until_ready(y)

    # Reference check (plain JAX)
    y_ref = (x @ w_down.T) @ w_up.T
    assert y.shape == (batch, seq, output_dim)
    assert jnp.allclose(y, y_ref, atol=1e-5, rtol=1e-5)

    print("KERNEL_OK")
</pallas_src>

<mosaic_0001>
module attributes {stable_mosaic.version = 11 : i64} {
  func.func @_lora_kernel(%arg0: i32, %arg1: memref<16x32xf32, #tpu.memory_space<vmem>>, %arg2: memref<4x32xf32, #tpu.memory_space<vmem>>, %arg3: memref<4x32xf32, #tpu.memory_space<vmem>>, %arg4: memref<16x32xf32, #tpu.memory_space<vmem>>) attributes {dimension_semantics = [#tpu.dimension_semantics<parallel>], iteration_bounds = array<i64: 1>, scalar_prefetch = 0 : i64, scratch_operands = 0 : i64, tpu.core_type = #tpu.core_type<tc>, window_params = [{transform_indices = @transform_0, window_bounds = array<i64: 16, 32>}, {pipeline_mode = #tpu.pipeline_mode<synchronous>, transform_indices = @transform_1, window_bounds = array<i64: 4, 32>}, {pipeline_mode = #tpu.pipeline_mode<synchronous>, transform_indices = @transform_2, window_bounds = array<i64: 4, 32>}, {transform_indices = @transform_3, window_bounds = array<i64: 16, 32>}]} {
    %c0 = arith.constant 0 : index
    %c0_0 = arith.constant 0 : index
    %0 = vector.load %arg1[%c0, %c0_0] : memref<16x32xf32, #tpu.memory_space<vmem>>, vector<16x32xf32>
    %c0_1 = arith.constant 0 : index
    %c0_2 = arith.constant 0 : index
    %1 = vector.load %arg2[%c0_1, %c0_2] : memref<4x32xf32, #tpu.memory_space<vmem>>, vector<4x32xf32>
    %cst = arith.constant dense<0.000000e+00> : vector<16x4xf32>
    %2 = tpu.matmul %0, %1, %cst {dimension_numbers = #tpu.dot_dimension_numbers<[1], [1], [0], [0], [0, 0, 1, 0], [], []>} : vector<16x32xf32>, vector<4x32xf32>, vector<16x4xf32> -> vector<16x4xf32>
    %c0_3 = arith.constant 0 : index
    %c0_4 = arith.constant 0 : index
    %3 = vector.load %arg3[%c0_3, %c0_4] : memref<4x32xf32, #tpu.memory_space<vmem>>, vector<4x32xf32>
    %cst_5 = arith.constant dense<0.000000e+00> : vector<16x32xf32>
    %4 = tpu.matmul %2, %3, %cst_5 {dimension_numbers = #tpu.dot_dimension_numbers<[1], [0], [0], [1], [0, 0, 1, 1], [], []>} : vector<16x4xf32>, vector<4x32xf32>, vector<16x32xf32> -> vector<16x32xf32>
    %c0_6 = arith.constant 0 : index
    %c0_7 = arith.constant 0 : index
    %5 = vector.load %arg4[%c0_6, %c0_7] : memref<16x32xf32, #tpu.memory_space<vmem>>, vector<16x32xf32>
    tpu.vector_store %arg4[%c0_6, %c0_7], %4 {strides = array<i32>} : memref<16x32xf32, #tpu.memory_space<vmem>>, vector<16x32xf32>,
    return
  }
  func.func @transform_0(%arg0: i32) -> (i32, i32) {
    %c0_i32 = arith.constant 0 : i32
    %c0_i32_0 = arith.constant 0 : i32
    return %arg0, %c0_i32 : i32, i32
  }
  func.func @transform_1(%arg0: i32) -> (i32, i32) {
    %c0_i32 = arith.constant 0 : i32
    %c0_i32_0 = arith.constant 0 : i32
    %c0_i32_1 = arith.constant 0 : i32
    return %c0_i32, %c0_i32_0 : i32, i32
  }
  func.func @transform_2(%arg0: i32) -> (i32, i32) {
    %c0_i32 = arith.constant 0 : i32
    %c0_i32_0 = arith.constant 0 : i32
    %c0_i32_1 = arith.constant 0 : i32
    return %c0_i32, %c0_i32_0 : i32, i32
  }
  func.func @transform_3(%arg0: i32) -> (i32, i32) {
    %c0_i32 = arith.constant 0 : i32
    %c0_i32_0 = arith.constant 0 : i32
    return %arg0, %c0_i32 : i32, i32
  }
}

</mosaic_0001>

<llo_original>
// kernel: tpu_custom_call.1
$region0: #{tpu_custom_call.1}
  #allocation0 [shape = 'u32[]', space=smem, size = 0x4, offset = 0x4, fixed_abs, tag = 'smem constant byte address 0x4 - core index']
  #allocation1 [shape = 'u32[144,128]{1,0:T(1,128)}', space=vmem, size = 0x12000, scoped, tag = 'internal scratch']
  %s0 = inlined_call_operand.hbm [shape: f32[16,32], index: 0, kind: input, shape index: {}]
  %s1 = inlined_call_operand.hbm [shape: f32[4,32], index: 1, kind: input, shape index: {}]
  %s2 = inlined_call_operand.vmem [shape: f32[4,32], index: 2, kind: input, shape index: {}]
  %s3 = inlined_call_operand.hbm [shape: f32[16,32], index: 3, kind: output, shape index: {}]
  %s4 = sld [smem:[#allocation0]]
  $region30: #{tpu_custom_call.1} parent=0
    _
  %s6 = ssub.s32 1, %s4
  %s7 = scalar_select 0, %s6, %s4
  $region1: #{tpu_custom_call.1} parent=0
    #allocation2 [shape = 'u8[8192]{0}', space=vmem, size = 0x2000, scoped, tag = 'input window, operand 0, single buffered']
    #allocation3 [shape = 's32[1]{0}', space=sflag, size = 0x4, scoped, tag = 'scoped memory for tpu_custom_call.1']
    #allocation4 [shape = 's32[1]{0}', space=sflag, size = 0x4, scoped, tag = 'scoped memory for tpu_custom_call.1']
    #allocation5 [shape = 'u8[2048]{0}', space=vmem, size = 0x800, scoped, tag = 'input window, operand 1, single buffered']
    #allocation6 [shape = 's32[1]{0}', space=sflag, size = 0x4, scoped, tag = 'scoped memory for tpu_custom_call.1']
    #allocation7 [shape = 'u8[8192]{0}', space=vmem, size = 0x2000, scoped, tag = 'output window, operand 0, single buffered']
    %8 = vsyncpa [#allocation3], 0
    %9 = vsyncpa [#allocation6], 0
    %10 = vsyncpa [#allocation4], 0
    // Predicated region
    $region2: #{tpu_custom_call.1} parent=1 // pred_check
      _
    $region3: #{tpu_custom_call.1} parent=1 // pred_check_branch
      %12 = sbr.rel (0) target = $region5
    $region4: #{tpu_custom_call.1} parent=1 // pred_region
      %s14 = ssub.s32 256, 256
      %15 = vsyncadd [#allocation3], %s14
      %s16 = sshll.u32 [#allocation2], 4
      %s17 = int_to_ptr.vmem [resolvable:$true] %s16
      %22 = dma.hbm_to_vmem [thread:$0]  %s0, 256, %s17, [#allocation3], 128, 128, 8
    $region5: #{tpu_custom_call.1} parent=1 // pred_fallthru
      _
    // Predicated region
    $region6: #{tpu_custom_call.1} parent=1 // pred_check
      _
    $region7: #{tpu_custom_call.1} parent=1 // pred_check_branch
      %24 = sbr.rel (0) target = $region9
    $region8: #{tpu_custom_call.1} parent=1 // pred_region
      %s26 = ssub.s32 64, 64
      %27 = vsyncadd [#allocation6], %s26
      %s29 = sshll.u32 [#allocation5], 4
      %s30 = int_to_ptr.vmem [resolvable:$true] %s29
      %32 = dma.hbm_to_vmem [thread:$0]  %s1, 64, %s30, [#allocation6]
    $region9: #{tpu_custom_call.1} parent=1 // pred_fallthru
      _
    // Predicated region
    $region10: #{tpu_custom_call.1} parent=1 // pred_check
      _
    $region11: #{tpu_custom_call.1} parent=1 // pred_check_branch
      %34 = sbr.rel (0) target = $region13
    $region12: #{tpu_custom_call.1} parent=1 // pred_region
      _
    $region13: #{tpu_custom_call.1} parent=1 // pred_fallthru
      _
    // Predicated region
    $region14: #{tpu_custom_call.1} parent=1 // pred_check
      _
    $region15: #{tpu_custom_call.1} parent=1 // pred_check_branch
      %36 = sbr.rel (0) target = $region17
    $region16: #{tpu_custom_call.1} parent=1 // pred_region
      %37 = dma.done [#allocation3], 256
    $region17: #{tpu_custom_call.1} parent=1 // pred_fallthru
      _
    // Predicated region
    $region18: #{tpu_custom_call.1} parent=1 // pred_check
      _
    $region19: #{tpu_custom_call.1} parent=1 // pred_check_branch
      %39 = sbr.rel (0) target = $region21
    $region20: #{tpu_custom_call.1} parent=1 // pred_region
      %40 = dma.done [#allocation6], 64
    $region21: #{tpu_custom_call.1} parent=1 // pred_fallthru
      _
    %v41 = vld [vmem:[#allocation2] sm:$0xff]
    %v42 = vld [vmem:[#allocation2 + $0x8] sm:$0xff]
    %v43 = vld [vmem:[#allocation5] sm:$0xf]
    %vm44 = vcmask 261120
    %v46 = vsel %vm44, %v41, 0
    %v49 = vsel %vm44, %v42, 0
    %v52 = vsel %vm44, %v43, 0
    %54 = vmatprep.subr.mxu0 0.0
    %55 = vmatpush1.xpose.msra.mxu0 %v52
    %56 = vmatprep.subr.mxu0 0.0
    %57 = vmatpush1.xpose.msra.mxu0 0.0
    %58 = vmatprep.subr.mxu0 0.0
    %59 = vmatpush1.xpose.msra.mxu0 0.0
    %60 = vmatprep.subr.mxu0 0.0
    %61 = vmatpush1.xpose.msra.mxu0 0.0
    %62 = vmatprep.subr.mxu0 0.0
    %63 = vmatpush1.xpose.msra.mxu0 0.0
    %64 = vmatprep.subr.mxu0 0.0
    %65 = vmatpush1.xpose.msra.mxu0 0.0
    %66 = vmatprep.subr.mxu0 0.0
    %67 = vmatpush1.xpose.msra.mxu0 0.0
    %68 = vmatprep.subr.mxu0 0.0
    %69 = vmatpush1.xpose.msra.mxu0 0.0
    %70 = vmatprep.subr.mxu0 0.0
    %71 = vmatpush1.xpose.msra.mxu0 0.0
    %72 = vmatprep.subr.mxu0 0.0
    %73 = vmatpush1.xpose.msra.mxu0 0.0
    %74 = vmatprep.subr.mxu0 0.0
    %75 = vmatpush1.xpose.msra.mxu0 0.0
    %76 = vmatprep.subr.mxu0 0.0
    %77 = vmatpush1.xpose.msra.mxu0 0.0
    %78 = vmatprep.subr.mxu0 0.0
    %79 = vmatpush1.xpose.msra.mxu0 0.0
    %80 = vmatprep.subr.mxu0 0.0
    %81 = vmatpush1.xpose.msra.mxu0 0.0
    %82 = vmatprep.subr.mxu0 0.0
    %83 = vmatpush1.xpose.msra.mxu0 0.0
    %84 = vmatprep.subr.mxu0 0.0
    %85 = vmatpush1.xpose.msra.mxu0 0.0
    %86 = vmatprep.subr.mxu0 0.0
    %87 = vmatpush1.xpose.msra.mxu0 0.0
    %88 = vmatprep.subr.mxu0 0.0
    %89 = vmatpush1.xpose.msra.mxu0 0.0
    %90 = vmatprep.subr.mxu0 0.0
    %91 = vmatpush1.xpose.msra.mxu0 0.0
    %92 = vmatprep.subr.mxu0 0.0
    %93 = vmatpush1.xpose.msra.mxu0 0.0
    %94 = vmatprep.subr.mxu0 0.0
    %95 = vmatpush1.xpose.msra.mxu0 0.0
    %96 = vmatprep.subr.mxu0 0.0
    %97 = vmatpush1.xpose.msra.mxu0 0.0
    %98 = vmatprep.subr.mxu0 0.0
    %99 = vmatpush1.xpose.msra.mxu0 0.0
    %100 = vmatprep.subr.mxu0 0.0
    %101 = vmatpush1.xpose.msra.mxu0 0.0
    %102 = vmatprep.subr.mxu0 0.0
    %103 = vmatpush1.xpose.msra.mxu0 0.0
    %104 = vmatprep.subr.mxu0 0.0
    %105 = vmatpush1.xpose.msra.mxu0 0.0
    %106 = vmatprep.subr.mxu0 0.0
    %107 = vmatpush1.xpose.msra.mxu0 0.0
    %108 = vmatprep.subr.mxu0 0.0
    %109 = vmatpush1.xpose.msra.mxu0 0.0
    %110 = vmatprep.subr.mxu0 0.0
    %111 = vmatpush1.xpose.msra.mxu0 0.0
    %112 = vmatprep.subr.mxu0 0.0
    %113 = vmatpush1.xpose.msra.mxu0 0.0
    %114 = vmatprep.subr.mxu0 0.0
    %115 = vmatpush1.xpose.msra.mxu0 0.0
    %116 = vmatprep.subr.mxu0 0.0
    %117 = vmatpush1.xpose.msra.mxu0 0.0
    %118 = vmatprep.mubr.f32.mxu0 0.0
    %119 = vmatmul.mubr.f32.gmra.mrb[0].mxu0 %v46
    %v120 = vpop.f32.mrb[0].mxu0
    %v121 = vadd.f32 0.0, %v120
    %v122 = vpop.f32.mrb[0].mxu0
    %123 = vmatprep.mubr.f32.mxu0 0.0
    %124 = vmatmul.mubr.f32.gmra.mrb[0].mxu0 %v49
    %v125 = vpop.f32.mrb[0].mxu0
    %v126 = vadd.f32 0.0, %v125
    %v127 = vpop.f32.mrb[0].mxu0
    %128 = vdwg.mxu0
    %v129 = vld [vmem:[%s2] sm:$0xf]
    %vm130 = vcmask 31744
    %v132 = vsel %vm130, %v121, 0
    %v135 = vsel %vm130, %v126, 0
    %vm137 = vcmask 1043456
    %v139 = vsel %vm137, %v129, 0
    %141 = vmatprep.subr.mxu0 0.0
    %142 = vmatpush1.msra.mxu0 %v139
    %143 = vmatprep.subr.mxu0 0.0
    %144 = vmatpush1.msra.mxu0 0.0
    %145 = vmatprep.subr.mxu0 0.0
    %146 = vmatpush1.msra.mxu0 0.0
    %147 = vmatprep.subr.mxu0 0.0
    %148 = vmatpush1.msra.mxu0 0.0
    %149 = vmatprep.subr.mxu0 0.0
    %150 = vmatpush1.msra.mxu0 0.0
    %151 = vmatprep.subr.mxu0 0.0
    %152 = vmatpush1.msra.mxu0 0.0
    %153 = vmatprep.subr.mxu0 0.0
    %154 = vmatpush1.msra.mxu0 0.0
    %155 = vmatprep.subr.mxu0 0.0
    %156 = vmatpush1.msra.mxu0 0.0
    %157 = vmatprep.subr.mxu0 0.0
    %158 = vmatpush1.msra.mxu0 0.0
    %159 = vmatprep.subr.mxu0 0.0
    %160 = vmatpush1.msra.mxu0 0.0
    %161 = vmatprep.subr.mxu0 0.0
    %162 = vmatpush1.msra.mxu0 0.0
    %163 = vmatprep.subr.mxu0 0.0
    %164 = vmatpush1.msra.mxu0 0.0
    %165 = vmatprep.subr.mxu0 0.0
    %166 = vmatpush1.msra.mxu0 0.0
    %167 = vmatprep.subr.mxu0 0.0
    %168 = vmatpush1.msra.mxu0 0.0
    %169 = vmatprep.subr.mxu0 0.0
    %170 = vmatpush1.msra.mxu0 0.0
    %171 = vmatprep.subr.mxu0 0.0
    %172 = vmatpush1.msra.mxu0 0.0
    %173 = vmatprep.subr.mxu0 0.0
    %174 = vmatpush1.msra.mxu0 0.0
    %175 = vmatprep.subr.mxu0 0.0
    %176 = vmatpush1.msra.mxu0 0.0
    %177 = vmatprep.subr.mxu0 0.0
    %178 = vmatpush1.msra.mxu0 0.0
    %179 = vmatprep.subr.mxu0 0.0
    %180 = vmatpush1.msra.mxu0 0.0
    %181 = vmatprep.subr.mxu0 0.0
    %182 = vmatpush1.msra.mxu0 0.0
    %183 = vmatprep.subr.mxu0 0.0
    %184 = vmatpush1.msra.mxu0 0.0
    %185 = vmatprep.subr.mxu0 0.0
    %186 = vmatpush1.msra.mxu0 0.0
    %187 = vmatprep.subr.mxu0 0.0
    %188 = vmatpush1.msra.mxu0 0.0
    %189 = vmatprep.subr.mxu0 0.0
    %190 = vmatpush1.msra.mxu0 0.0
    %191 = vmatprep.subr.mxu0 0.0
    %192 = vmatpush1.msra.mxu0 0.0
    %193 = vmatprep.subr.mxu0 0.0
    %194 = vmatpush1.msra.mxu0 0.0
    %195 = vmatprep.subr.mxu0 0.0
    %196 = vmatpush1.msra.mxu0 0.0
    %197 = vmatprep.subr.mxu0 0.0
    %198 = vmatpush1.msra.mxu0 0.0
    %199 = vmatprep.subr.mxu0 0.0
    %200 = vmatpush1.msra.mxu0 0.0
    %201 = vmatprep.subr.mxu0 0.0
    %202 = vmatpush1.msra.mxu0 0.0
    %203 = vmatprep.subr.mxu0 0.0
    %204 = vmatpush1.msra.mxu0 0.0
    %205 = vmatprep.mubr.f32.mxu0 0.0
    %206 = vmatmul.mubr.f32.gmra.mrb[0].mxu0 %v132
    %v207 = vpop.f32.mrb[0].mxu0
    %v208 = vadd.f32 0.0, %v207
    %v209 = vpop.f32.mrb[0].mxu0
    %210 = vmatprep.mubr.f32.mxu0 0.0
    %211 = vmatmul.mubr.f32.gmra.mrb[0].mxu0 %v135
    %v212 = vpop.f32.mrb[0].mxu0
    %v213 = vadd.f32 0.0, %v212
    %v214 = vpop.f32.mrb[0].mxu0
    %215 = vdwg.mxu0
    %216 = vst.msk [vmem:[#allocation7] sm:$0xff] %vm44, %v208
    %217 = vst.msk [vmem:[#allocation7 + $0x8] sm:$0xff] %vm44, %v213
    // Predicated region
    $region22: #{tpu_custom_call.1} parent=1 // pred_check
      _
    $region23: #{tpu_custom_call.1} parent=1 // pred_check_branch
      %219 = sbr.rel (0) target = $region25
    $region24: #{tpu_custom_call.1} parent=1 // pred_region
      %s221 = ssub.s32 256, 256
      %222 = vsyncadd [#allocation4], %s221
      %s223 = sshll.u32 [#allocation7], 4
      %s224 = int_to_ptr.vmem [resolvable:$true] %s223
      %229 = dma.vmem_to_hbm [thread:$0]  %s224, 256, %s3, [#allocation4], 128, 128, 8
    $region25: #{tpu_custom_call.1} parent=1 // pred_fallthru
      _
    // Predicated region
    $region26: #{tpu_custom_call.1} parent=1 // pred_check
      _
    $region27: #{tpu_custom_call.1} parent=1 // pred_check_branch
      %231 = sbr.rel (0) target = $region29
    $region28: #{tpu_custom_call.1} parent=1 // pred_region
      %232 = dma.done [#allocation4], 256
    $region29: #{tpu_custom_call.1} parent=1 // pred_fallthru
      _
    %233 = vsyncpa [#allocation3], 1
    %234 = vsyncpa [#allocation6], 1
    %235 = vsyncpa [#allocation4], 1

</llo_original>
